<compile_context>
chip_gen: v6e
topology: v6e:2x2x1
jax: 0.10.0
libtpu: 0.0.40
codegen_flags: <defaults>
</compile_context>

<pallas_src>
import functools
import math

import jax
import jax.numpy as jnp
from jax.experimental import pallas as pl
from jax.experimental.pallas import tpu as pltpu


_INV_SQRT2 = 1.0 / math.sqrt(2.0)


def _gelu_exact(x):
    # matches torch.nn.functional.gelu(approximate='none')
    return 0.5 * x * (1.0 + jax.lax.erf(x * _INV_SQRT2))


def _round_up(x, m):
    return (x + m - 1) // m * m


def _mel_kernel(t_valid, row_stride,
                x_hbm, w1c_ref, b1_ref, w2c_ref, b2_ref,
                o_ref, xs_ref, sem):
    # x_hbm   : (B*row_stride, Cp) zero-padded input, NWC flattened over (batch, time), in HBM
    # w1c_ref : (3*Cp, Dp)  fused im2col conv1 weights  [tap0 | tap1 | tap2] along rows
    # b1_ref  : (1, Dp)
    # w2c_ref : (3*Dp, Dp)  fused im2col conv2 weights
    # b2_ref  : (1, Dp)
    # o_ref   : (1, tT, Dp) output tile (lane-dense: Dp % 128 == 0)
    # xs_ref  : (tT+4, Cp)  VMEM slab scratch, sem: DMA semaphore
    tT = o_ref.shape[1]
    b = pl.program_id(0)
    t = pl.program_id(1)
    t0 = t * tT

    # Fetch the overlapping input slab: padded-time rows [t0, t0 + tT + 4) of batch b.
    # (2-row halo on each side; conv1's zero padding is baked into the wrapper padding.)
    row0 = pl.multiple_of(b * row_stride + t0, 8)
    cp = pltpu.make_async_copy(x_hbm.at[pl.ds(row0, tT + 4)], xs_ref, sem)
    cp.start()
    cp.wait()

    xs = xs_ref[...]                                              # (tT+4, Cp)

    # ---- conv1d_1: single MXU matmul, K = 3*Cp (im2col of the 3 taps) ----
    xc = jnp.concatenate([xs[0:tT + 2], xs[1:tT + 3], xs[2:tT + 4]], axis=-1)
    h = jnp.dot(xc, w1c_ref[...], preferred_element_type=jnp.float32)
    h = _gelu_exact(h + b1_ref[...])                              # (tT+2, Dp), f32

    # conv2's zero padding: zero-mask h rows whose global time is outside [0, T).
    m = jax.lax.broadcasted_iota(jnp.int32, (tT + 2, 1), 0)
    gt = t0 - 1 + m                                               # global time of h row m
    h = jnp.where((gt >= 0) & (gt < t_valid), h, 0.0)

    # ---- conv1d_2: single MXU matmul, K = 3*Dp ----
    hc = jnp.concatenate([h[0:tT], h[1:tT + 1], h[2:tT + 2]], axis=-1)
    g = jnp.dot(hc.astype(w2c_ref.dtype), w2c_ref[...],
                preferred_element_type=jnp.float32)
    g = _gelu_exact(g + b2_ref[...])                              # (tT, Dp)

    o_ref[0] = g.astype(o_ref.dtype)


def mel_extractor(x_ncw, w1, b1, w2, b2, *, t_tile=512):
    """x_ncw: (B, mel_channels, T) PyTorch NCW. Returns (B, d_model, T)."""
    B, Cin, T = x_ncw.shape
    D = w1.shape[0]
    Cp = _round_up(Cin, 128)          # lane-pad input channels
    Dp = _round_up(D, 128)            # lane-pad output channels (dense vst, full MXU N)
    tT = min(_round_up(T, 8), _round_up(t_tile, 8))
    Tg = _round_up(T, tT)
    nT = Tg // tT
    stride = _round_up(Tg + 4, 8)     # padded rows per batch element (8-aligned DMA offsets)

    # Activations to NWC, zero-pad: 2 halo rows front, (stride-T-2) back, channels to Cp.
    x = jnp.transpose(x_ncw, (0, 2, 1))                                 # (B, T, Cin)
    x = jnp.pad(x, ((0, 0), (2, stride - T - 2), (0, Cp - Cin)))        # (B, stride, Cp)
    x_flat = x.reshape(B * stride, Cp)

    # Fused im2col weights: rows ordered [tap0 channels | tap1 channels | tap2 channels],
    # matching the kernel's concat([x(u-1), x(u), x(u+1)]) column order. Padding is zeros
    # so the extra channels contribute exactly nothing.
    w1c = jnp.pad(jnp.transpose(w1, (2, 1, 0)),
                  ((0, 0), (0, Cp - Cin), (0, Dp - D))).reshape(3 * Cp, Dp)
    w2c = jnp.pad(jnp.transpose(w2, (2, 1, 0)),
                  ((0, 0), (0, Dp - D), (0, Dp - D))).reshape(3 * Dp, Dp)
    b1p = jnp.pad(b1, (0, Dp - D)).reshape(1, Dp)
    b2p = jnp.pad(b2, (0, Dp - D)).reshape(1, Dp)

    kernel = functools.partial(_mel_kernel, T, stride)

    out = pl.pallas_call(
        kernel,
        out_shape=jax.ShapeDtypeStruct((B, Tg, Dp), x_ncw.dtype),
        grid_spec=pltpu.PrefetchScalarGridSpec(
            num_scalar_prefetch=0,
            grid=(B, nT),
            in_specs=[
                pl.BlockSpec(memory_space=pl.ANY),                # x stays in HBM (manual DMA)
                pl.BlockSpec((3 * Cp, Dp), lambda b, t: (0, 0)),
                pl.BlockSpec((1, Dp),      lambda b, t: (0, 0)),
                pl.BlockSpec((3 * Dp, Dp), lambda b, t: (0, 0)),
                pl.BlockSpec((1, Dp),      lambda b, t: (0, 0)),
            ],
            out_specs=pl.BlockSpec((1, tT, Dp), lambda b, t: (b, t, 0)),
            scratch_shapes=[
                pltpu.VMEM((tT + 4, Cp), x_ncw.dtype),            # overlapping input slab
                pltpu.SemaphoreType.DMA(()),
            ],
        ),
        compiler_params=pltpu.CompilerParams(
            dimension_semantics=("parallel", "parallel")),
    )(x_flat, w1c, b1p, w2c, b2p)

    # Slice off channel/time padding, back to PyTorch NCW.
    # TODO(synk): if the consumer accepts NWC, drop this transpose and hand it (B, T, D) directly.
    return jnp.transpose(out[:, :T, :D], (0, 2, 1))


def ref_forward(x, w1, b1, w2, b2):
    """Plain-JAX reference: two NCW conv1d (k=3, p=1) + exact GELU."""
    dn = ('NCH', 'OIH', 'NCH')

    def conv(z, w, b):
        y = jax.lax.conv_general_dilated(z, w, window_strides=(1,),
                                         padding=((1, 1),),
                                         dimension_numbers=dn)
        return y + b[None, :, None]

    h = jax.nn.gelu(conv(x, w1, b1), approximate=False)
    return jax.nn.gelu(conv(h, w2, b2), approximate=False)


if __name__ == "__main__":
    B, mel_channels, d_model, T = 2, 16, 32, 40

    key = jax.random.PRNGKey(0)
    k1, k2, k3, k4, kx = jax.random.split(key, 5)

    # Conv1d parameter shapes (PyTorch convention): (out, in, kernel_size)
    w1 = jax.random.normal(k1, (d_model, mel_channels, 3), jnp.float32) * 0.1
    b1 = jax.random.normal(k2, (d_model,), jnp.float32) * 0.1
    w2 = jax.random.normal(k3, (d_model, d_model, 3), jnp.float32) * 0.1
    b2 = jax.random.normal(k4, (d_model,), jnp.float32) * 0.1

    x = jax.random.normal(kx, (B, mel_channels, T), jnp.float32)

    # t_tile=16 forces multiple time tiles at this small T, exercising the halo/mask path.
    y = mel_extractor(x, w1, b1, w2, b2, t_tile=16)
    y = jax.block_until_ready(y)

    y_ref = ref_forward(x, w1, b1, w2, b2)
    assert y.shape == (B, d_model, T), y.shape
    max_err = float(jnp.max(jnp.abs(y - y_ref)))
    assert jnp.allclose(y, y_ref, atol=2e-5, rtol=2e-5), max_err

    print("KERNEL_OK")
</pallas_src>

<mosaic_0001>
module attributes {stable_mosaic.version = 11 : i64} {
  func.func @_mel_kernel(%arg0: i32, %arg1: i32, %arg2: memref<112x128xf32, #tpu.memory_space<any>>, %arg3: memref<384x128xf32, #tpu.memory_space<vmem>>, %arg4: memref<1x128xf32, #tpu.memory_space<vmem>>, %arg5: memref<384x128xf32, #tpu.memory_space<vmem>>, %arg6: memref<1x128xf32, #tpu.memory_space<vmem>>, %arg7: memref<1x16x128xf32, #tpu.memory_space<vmem>>, %arg8: memref<20x128xf32, #tpu.memory_space<vmem>>, %arg9: memref<!tpu.dma_semaphore, #tpu.memory_space<semaphore_mem>>) attributes {dimension_semantics = [#tpu.dimension_semantics<parallel>, #tpu.dimension_semantics<parallel>], iteration_bounds = array<i64: 2, 3>, scalar_prefetch = 0 : i64, scratch_operands = 2 : i64, tpu.core_type = #tpu.core_type<tc>, window_params = [{}, {pipeline_mode = #tpu.pipeline_mode<synchronous>, transform_indices = @transform_1, window_bounds = array<i64: 384, 128>}, {pipeline_mode = #tpu.pipeline_mode<synchronous>, transform_indices = @transform_2, window_bounds = array<i64: 1, 128>}, {pipeline_mode = #tpu.pipeline_mode<synchronous>, transform_indices = @transform_3, window_bounds = array<i64: 384, 128>}, {pipeline_mode = #tpu.pipeline_mode<synchronous>, transform_indices = @transform_4, window_bounds = array<i64: 1, 128>}, {transform_indices = @transform_5, window_bounds = array<i64: 1, 16, 128>}]} {
    %c16_i32 = arith.constant 16 : i32
    %0 = arith.muli %arg1, %c16_i32 : i32
    %c56_i32 = arith.constant 56 : i32
    %1 = arith.muli %arg0, %c56_i32 : i32
    %2 = arith.addi %1, %0 : i32
    %3 = tpu.assume_multiple %2, 8 : i32
    %c0_i32 = arith.constant 0 : i32
    %4 = tpu.memref_slice %arg2[%3, %c0_i32] : memref<112x128xf32, #tpu.memory_space<any>> -> memref<20x128xf32, #tpu.memory_space<any>>
    tpu.enqueue_dma source(%4 : memref<20x128xf32, #tpu.memory_space<any>>) target(%arg8 : memref<20x128xf32, #tpu.memory_space<vmem>>) target_semaphore(%arg9 : memref<!tpu.dma_semaphore, #tpu.memory_space<semaphore_mem>>)
    %c0_i32_0 = arith.constant 0 : i32
    %5 = tpu.memref_slice %arg2[%3, %c0_i32_0] : memref<112x128xf32, #tpu.memory_space<any>> -> memref<20x128xf32, #tpu.memory_space<any>>
    tpu.wait_dma2 semaphore(%arg9 : memref<!tpu.dma_semaphore, #tpu.memory_space<semaphore_mem>>) src(%5 : memref<20x128xf32, #tpu.memory_space<any>>) dst(%arg8 : memref<20x128xf32, #tpu.memory_space<vmem>>)
    %c0 = arith.constant 0 : index
    %c0_1 = arith.constant 0 : index
    %6 = vector.load %arg8[%c0, %c0_1] : memref<20x128xf32, #tpu.memory_space<vmem>>, vector<20x128xf32>
    %7 = vector.extract_strided_slice %6 {offsets = [0, 0], sizes = [18, 128], strides = [1, 1]} : vector<20x128xf32> to vector<18x128xf32>
    %8 = vector.extract_strided_slice %6 {offsets = [1, 0], sizes = [18, 128], strides = [1, 1]} : vector<20x128xf32> to vector<18x128xf32>
    %9 = vector.extract_strided_slice %6 {offsets = [2, 0], sizes = [18, 128], strides = [1, 1]} : vector<20x128xf32> to vector<18x128xf32>
    %10 = tpu.concatenate %7, %8, %9 in 1 : vector<18x128xf32>, vector<18x128xf32>, vector<18x128xf32> -> vector<18x384xf32>
    %c0_2 = arith.constant 0 : index
    %c0_3 = arith.constant 0 : index
    %11 = vector.load %arg3[%c0_2, %c0_3] : memref<384x128xf32, #tpu.memory_space<vmem>>, vector<384x128xf32>
    %cst = arith.constant dense<0.000000e+00> : vector<18x128xf32>
    %12 = tpu.matmul %10, %11, %cst {dimension_numbers = #tpu.dot_dimension_numbers<[1], [0], [0], [1], [0, 0, 1, 1], [], []>} : vector<18x384xf32>, vector<384x128xf32>, vector<18x128xf32> -> vector<18x128xf32>
    %c0_4 = arith.constant 0 : index
    %c0_5 = arith.constant 0 : index
    %13 = vector.load %arg4[%c0_4, %c0_5] : memref<1x128xf32, #tpu.memory_space<vmem>>, vector<1x128xf32>
    %14 = vector.broadcast %13 : vector<1x128xf32> to vector<18x128xf32>
    %15 = arith.addf %12, %14 : vector<18x128xf32>
    %cst_6 = arith.constant 5.000000e-01 : f32
    %16 = vector.broadcast %cst_6 : f32 to vector<18x128xf32>
    %17 = arith.mulf %16, %15 : vector<18x128xf32>
    %cst_7 = arith.constant 0.707106769 : f32
    %18 = vector.broadcast %cst_7 : f32 to vector<18x128xf32>
    %19 = arith.mulf %15, %18 : vector<18x128xf32>
    %20 = math.erf %19 : vector<18x128xf32>
    %cst_8 = arith.constant 1.000000e+00 : f32
    %21 = vector.broadcast %cst_8 : f32 to vector<18x128xf32>
    %22 = arith.addf %21, %20 : vector<18x128xf32>
    %23 = arith.mulf %17, %22 : vector<18x128xf32>
    %24 = tpu.iota {dimensions = array<i32: 0>} : vector<18x1xi32>
    %c1_i32 = arith.constant 1 : i32
    %25 = arith.subi %0, %c1_i32 : i32
    %26 = vector.broadcast %25 : i32 to vector<18x1xi32>
    %27 = arith.addi %26, %24 : vector<18x1xi32>
    %c0_i32_9 = arith.constant 0 : i32
    %28 = vector.broadcast %c0_i32_9 : i32 to vector<18x1xi32>
    %29 = arith.cmpi sge, %27, %28 : vector<18x1xi32>
    %c40_i32 = arith.constant 40 : i32
    %30 = vector.broadcast %c40_i32 : i32 to vector<18x1xi32>
    %31 = arith.cmpi slt, %27, %30 : vector<18x1xi32>
    %32 = arith.andi %29, %31 : vector<18x1xi1>
    %cst_10 = arith.constant 0.000000e+00 : f32
    %33 = vector.shape_cast %32 : vector<18x1xi1> to vector<18x1xi1>
    %34 = vector.broadcast %33 : vector<18x1xi1> to vector<18x128xi1>
    %35 = vector.broadcast %cst_10 : f32 to vector<18x128xf32>
    %36 = arith.select %34, %23, %35 : vector<18x128xi1>, vector<18x128xf32>
    %37 = vector.extract_strided_slice %36 {offsets = [0, 0], sizes = [16, 128], strides = [1, 1]} : vector<18x128xf32> to vector<16x128xf32>
    %38 = vector.extract_strided_slice %36 {offsets = [1, 0], sizes = [16, 128], strides = [1, 1]} : vector<18x128xf32> to vector<16x128xf32>
    %39 = vector.extract_strided_slice %36 {offsets = [2, 0], sizes = [16, 128], strides = [1, 1]} : vector<18x128xf32> to vector<16x128xf32>
    %40 = tpu.concatenate %37, %38, %39 in 1 : vector<16x128xf32>, vector<16x128xf32>, vector<16x128xf32> -> vector<16x384xf32>
    %c0_11 = arith.constant 0 : index
    %c0_12 = arith.constant 0 : index
    %41 = vector.load %arg5[%c0_11, %c0_12] : memref<384x128xf32, #tpu.memory_space<vmem>>, vector<384x128xf32>
    %cst_13 = arith.constant dense<0.000000e+00> : vector<16x128xf32>
    %42 = tpu.matmul %40, %41, %cst_13 {dimension_numbers = #tpu.dot_dimension_numbers<[1], [0], [0], [1], [0, 0, 1, 1], [], []>} : vector<16x384xf32>, vector<384x128xf32>, vector<16x128xf32> -> vector<16x128xf32>
    %c0_14 = arith.constant 0 : index
    %c0_15 = arith.constant 0 : index
    %43 = vector.load %arg6[%c0_14, %c0_15] : memref<1x128xf32, #tpu.memory_space<vmem>>, vector<1x128xf32>
    %44 = vector.broadcast %43 : vector<1x128xf32> to vector<16x128xf32>
    %45 = arith.addf %42, %44 : vector<16x128xf32>
    %cst_16 = arith.constant 5.000000e-01 : f32
    %46 = vector.broadcast %cst_16 : f32 to vector<16x128xf32>
    %47 = arith.mulf %46, %45 : vector<16x128xf32>
    %cst_17 = arith.constant 0.707106769 : f32
    %48 = vector.broadcast %cst_17 : f32 to vector<16x128xf32>
    %49 = arith.mulf %45, %48 : vector<16x128xf32>
    %50 = math.erf %49 : vector<16x128xf32>
    %cst_18 = arith.constant 1.000000e+00 : f32
    %51 = vector.broadcast %cst_18 : f32 to vector<16x128xf32>
    %52 = arith.addf %51, %50 : vector<16x128xf32>
    %53 = arith.mulf %47, %52 : vector<16x128xf32>
    %c0_19 = arith.constant 0 : index
    %c0_20 = arith.constant 0 : index
    %c0_21 = arith.constant 0 : index
    %54 = vector.load %arg7[%c0_19, %c0_20, %c0_21] : memref<1x16x128xf32, #tpu.memory_space<vmem>>, vector<1x16x128xf32>
    %55 = vector.shape_cast %54 : vector<1x16x128xf32> to vector<16x128xf32>
    %56 = vector.shape_cast %53 : vector<16x128xf32> to vector<1x16x128xf32>
    tpu.vector_store %arg7[%c0_19, %c0_20, %c0_21], %56 {strides = array<i32>} : memref<1x16x128xf32, #tpu.memory_space<vmem>>, vector<1x16x128xf32>,
    return
  }
  func.func @transform_1(%arg0: i32, %arg1: i32) -> (i32, i32) {
    %c0_i32 = arith.constant 0 : i32
    %c0_i32_0 = arith.constant 0 : i32
    %c0_i32_1 = arith.constant 0 : i32
    return %c0_i32, %c0_i32_0 : i32, i32
  }
  func.func @transform_2(%arg0: i32, %arg1: i32) -> (i32, i32) {
    %c0_i32 = arith.constant 0 : i32
    %c0_i32_0 = arith.constant 0 : i32
    %c0_i32_1 = arith.constant 0 : i32
    return %c0_i32, %c0_i32_0 : i32, i32
  }
  func.func @transform_3(%arg0: i32, %arg1: i32) -> (i32, i32) {
    %c0_i32 = arith.constant 0 : i32
    %c0_i32_0 = arith.constant 0 : i32
    %c0_i32_1 = arith.constant 0 : i32
    return %c0_i32, %c0_i32_0 : i32, i32
  }
  func.func @transform_4(%arg0: i32, %arg1: i32) -> (i32, i32) {
    %c0_i32 = arith.constant 0 : i32
    %c0_i32_0 = arith.constant 0 : i32
    %c0_i32_1 = arith.constant 0 : i32
    return %c0_i32, %c0_i32_0 : i32, i32
  }
  func.func @transform_5(%arg0: i32, %arg1: i32) -> (i32, i32, i32) {
    %c0_i32 = arith.constant 0 : i32
    %c0_i32_0 = arith.constant 0 : i32
    return %arg0, %arg1, %c0_i32 : i32, i32, i32
  }
}

</mosaic_0001>

<llo_original>
// kernel: tpu_custom_call.1
$region0: #{tpu_custom_call.1}
  #allocation0 [shape = 'u32[]', space=smem, size = 0x4, offset = 0x4, fixed_abs, tag = 'smem constant byte address 0x4 - core index']
  #allocation1 [shape = 'u32[144,128]{1,0:T(1,128)}', space=vmem, size = 0x12000, scoped, tag = 'internal scratch']
  #allocation2 [shape = 'f32[20,128]{1,0:T(8,128)}', space=vmem, size = 0x3000, scoped, tag = 'scratch operand']
  #allocation3 [shape = 's32[1]{0}', space=sflag, size = 0x4, scoped, tag = 'scratch operand']
  #allocation10 [shape = 's32[]', space=sflag, size = 0x4, offset = 0, fixed_abs, tag = 'sflag constant byte address 0x0 - dummy sync flag']
  #allocation11 [shape = 's32[]', space=sflag, size = 0x4, offset = 0, fixed_abs, tag = 'sflag constant byte address 0x0 - dummy sync flag']
  #allocation12 [shape = 'u32[]', space=smem, size = 0x4, offset = 0x44, fixed_abs, tag = 'smem constant byte address 0x44 - assertion arg 0']
  #allocation13 [shape = 'u32[]', space=smem, size = 0x4, offset = 0x48, fixed_abs, tag = 'smem constant byte address 0x48 - assertion arg 1']
  %s0 = inlined_call_operand.hbm [shape: f32[112,128], index: 0, kind: input, shape index: {}]
  %s1 = inlined_call_operand.hbm [shape: f32[384,128], index: 1, kind: input, shape index: {}]
  %s2 = inlined_call_operand.vmem [shape: f32[1,128], index: 2, kind: input, shape index: {}]
  %s3 = inlined_call_operand.hbm [shape: f32[384,128], index: 3, kind: input, shape index: {}]
  %s4 = inlined_call_operand.vmem [shape: f32[1,128], index: 4, kind: input, shape index: {}]
  %s5 = inlined_call_operand.hbm [shape: f32[2,48,128], index: 5, kind: output, shape index: {}]
  %s6 = sld [smem:[#allocation0]]
  $region61: #{tpu_custom_call.1} parent=0
    _
  %s8 = ssub.s32 1, %s6
  %s9 = scalar_select 0, %s8, %s6
  $region1: #{tpu_custom_call.1} parent=0
    #allocation4 [shape = 'u8[196608]{0}', space=vmem, size = 0x30000, scoped, tag = 'input window, operand 1, single buffered']
    #allocation5 [shape = 's32[2]{0}', space=sflag, size = 0x8, scoped, tag = 'scoped memory for tpu_custom_call.1']
    #allocation6 [shape = 's32[2]{0}', space=sflag, size = 0x8, scoped, tag = 'scoped memory for tpu_custom_call.1']
    #allocation7 [shape = 'u8[196608]{0}', space=vmem, size = 0x30000, scoped, tag = 'input window, operand 3, single buffered']
    #allocation8 [shape = 's32[1]{0}', space=sflag, size = 0x4, scoped, tag = 'scoped memory for tpu_custom_call.1']
    #allocation9 [shape = 'u8[16384]{0}', space=vmem, size = 0x4000, scoped, tag = 'output window, operand 0']
    %10 = vsyncpa [#allocation5], 0
    %11 = vsyncpa [#allocation8], 0
    %12 = vsyncpa [#allocation6], 0
    %s13 = scalar_lea.sflag [#allocation6], 1
    %14 = vsyncpa %s13, 0
    loop: start=0, step=1, limit=8
    $region2: #{tpu_custom_call.1} parent=1 // loop_pre_header
      _
    $region3: #{tpu_custom_call.1} parent=1 // loop_header
      %s16 = sphi 0, %s20
      %p17 = scmp.ge.s32.totalorder %s16, 8
      %s23 = sphi 0, %s35
      %s24 = sphi 0, %s31
      %s25 = sphi 0, %s23
      %s26 = sphi 0, %s24
      %s27 = sphi 0, %s25
      %s28 = sphi 0, %s26
      %s36 = sphi 0, %s36
      %s38 = sphi 0, %s36
      %s39 = sphi 0, %s38
      %s53 = sphi 0, %s39
      %s57 = sphi 0, %s57
      %s59 = sphi 0, %s57
      %s60 = sphi 0, %s59
      %s74 = sphi 0, %s60
      %s78 = sphi 0, %s78
      %s80 = sphi 0, %s78
      %s81 = sphi 0, %s80
      %s95 = sphi 0, %s81
      %s99 = sphi 0, %s99
      %s101 = sphi 0, %s99
      %s102 = sphi 0, %s101
      %s116 = sphi 0, %s102
      %s124 = sphi 0, %s126
      %s127 = sphi 0, %s124
      %s128 = sphi 0, %s127
      %s144 = sphi 0, %s128
    $region4: #{tpu_custom_call.1} parent=1 // loop_header_branch
      %19 = sbr.rel (%p17) target = $region8
    $region5: #{tpu_custom_call.1} parent=1 // loop_body
      %s21 = ssub.s32 %s16, 1
      %s22 = ssub.s32 %s16, 2
      %s29 = sadd.s32 1, %s24
      %p30 = scmp.ge.s32.totalorder %s29, 3
      %s31 = scalar_select %p30, 0, %s29
      %s32 = sadd.s32 1, %s23
      %s33 = scalar_select %p30, %s32, %s23
      %p34 = scmp.ge.s32.totalorder %s33, 2
      %s35 = scalar_select %p34, 0, %s33
      %s37 = sadd.s32 %s36, 1
      %p40 = scmp.eq.s32.totalorder %s16, 5
      %p41 = scmp.ne.s32.totalorder %s36, %s38
      %p42 = scmp.eq.s32.totalorder %s16, 0
      %p43 = por %p41, %p42
      %p44 = scmp.ne.s32.totalorder %s36, %s38
      %p45 = scmp.eq.s32.totalorder %s21, 5
      %p46 = por %p44, %p45
      %p47 = scmp.ne.s32.totalorder %s38, %s39
      %p48 = scmp.eq.s32.totalorder %s21, 0
      %p49 = por %p47, %p48
      %p50 = scmp.ne.s32.totalorder %s38, %s39
      %p51 = scmp.eq.s32.totalorder %s22, 5
      %p52 = por %p50, %p51
      %p54 = scmp.ne.s32.totalorder %s39, %s53
      %p55 = scmp.eq.s32.totalorder %s22, 0
      %p56 = por %p54, %p55
      %s58 = sadd.s32 %s57, 1
      %p61 = scmp.eq.s32.totalorder %s16, 5
      %p62 = scmp.ne.s32.totalorder %s57, %s59
      %p63 = scmp.eq.s32.totalorder %s16, 0
      %p64 = por %p62, %p63
      %p65 = scmp.ne.s32.totalorder %s57, %s59
      %p66 = scmp.eq.s32.totalorder %s21, 5
      %p67 = por %p65, %p66
      %p68 = scmp.ne.s32.totalorder %s59, %s60
      %p69 = scmp.eq.s32.totalorder %s21, 0
      %p70 = por %p68, %p69
      %p71 = scmp.ne.s32.totalorder %s59, %s60
      %p72 = scmp.eq.s32.totalorder %s22, 5
      %p73 = por %p71, %p72
      %p75 = scmp.ne.s32.totalorder %s60, %s74
      %p76 = scmp.eq.s32.totalorder %s22, 0
      %p77 = por %p75, %p76
      %s79 = sadd.s32 %s78, 1
      %p82 = scmp.eq.s32.totalorder %s16, 5
      %p83 = scmp.ne.s32.totalorder %s78, %s80
      %p84 = scmp.eq.s32.totalorder %s16, 0
      %p85 = por %p83, %p84
      %p86 = scmp.ne.s32.totalorder %s78, %s80
      %p87 = scmp.eq.s32.totalorder %s21, 5
      %p88 = por %p86, %p87
      %p89 = scmp.ne.s32.totalorder %s80, %s81
      %p90 = scmp.eq.s32.totalorder %s21, 0
      %p91 = por %p89, %p90
      %p92 = scmp.ne.s32.totalorder %s80, %s81
      %p93 = scmp.eq.s32.totalorder %s22, 5
      %p94 = por %p92, %p93
      %p96 = scmp.ne.s32.totalorder %s81, %s95
      %p97 = scmp.eq.s32.totalorder %s22, 0
      %p98 = por %p96, %p97
      %s100 = sadd.s32 %s99, 1
      %p103 = scmp.eq.s32.totalorder %s16, 5
      %p104 = scmp.ne.s32.totalorder %s99, %s101
      %p105 = scmp.eq.s32.totalorder %s16, 0
      %p106 = por %p104, %p105
      %p107 = scmp.ne.s32.totalorder %s99, %s101
      %p108 = scmp.eq.s32.totalorder %s21, 5
      %p109 = por %p107, %p108
      %p110 = scmp.ne.s32.totalorder %s101, %s102
      %p111 = scmp.eq.s32.totalorder %s21, 0
      %p112 = por %p110, %p111
      %p113 = scmp.ne.s32.totalorder %s101, %s102
      %p114 = scmp.eq.s32.totalorder %s22, 5
      %p115 = por %p113, %p114
      %p117 = scmp.ne.s32.totalorder %s102, %s116
      %p118 = scmp.eq.s32.totalorder %s22, 0
      %p119 = por %p117, %p118
      %s120 = ssub.s32 %s23, %s35
      %s121 = ssub.s32 %s24, %s31
      %s122 = sor.u32 %s120, %s121
      %p123 = scmp.eq.s32.totalorder %s122, 0
      %s125 = sadd.s32 %s124, 1
      %s126 = scalar_select %p123, %s124, %s125
      %p129 = pneg %p123
      %p130 = scmp.eq.s32.totalorder %s16, 5
      %p131 = por %p129, %p130
      %p132 = scmp.ne.s32.totalorder %s124, %s127
      %p133 = scmp.eq.s32.totalorder %s16, 0
      %p134 = por %p132, %p133
      %p135 = scmp.ne.s32.totalorder %s124, %s127
      %p136 = scmp.eq.s32.totalorder %s21, 5
      %p137 = por %p135, %p136
      %p138 = scmp.ne.s32.totalorder %s127, %s128
      %p139 = scmp.eq.s32.totalorder %s21, 0
      %p140 = por %p138, %p139
      %p141 = scmp.ne.s32.totalorder %s127, %s128
      %p142 = scmp.eq.s32.totalorder %s22, 5
      %p143 = por %p141, %p142
      %p145 = scmp.ne.s32.totalorder %s128, %s144
      %p146 = scmp.eq.s32.totalorder %s22, 0
      %p147 = por %p145, %p146
      %p148 = scmp.le.s32.totalorder 1, %s16
      %p149 = scmp.lt.s32.totalorder %s16, 7
      %p150 = pnand %p148, %p149
      %p151 = pneg %p150
      // Predicated region
      $region9: #{tpu_custom_call.1} parent=5 // pred_check
        _
      $region10: #{tpu_custom_call.1} parent=5 // pred_check_branch
        %153 = sbr.rel (%p150) target = $region12
      $region11: #{tpu_custom_call.1} parent=5 // pred_region
        %s154 = ssub.s32 %s16, 1
        // Predicated region
        $region13: #{tpu_custom_call.1} parent=11 // pred_check
          %p155 = pneg %p49
        $region14: #{tpu_custom_call.1} parent=11 // pred_check_branch
          %157 = sbr.rel (%p155) target = $region16
        $region15: #{tpu_custom_call.1} parent=11 // pred_region
          %s159 = ssub.s32 6144, 6144
          %160 = vsyncadd [#allocation5], %s159
          %s161 = sshll.u32 [#allocation4], 4
          %s162 = int_to_ptr.vmem [resolvable:$true] %s161
          %167 = dma.hbm_to_vmem [thread:$0]  %s1, 6144, %s162, [#allocation5], 128, 128, 8
        $region16: #{tpu_custom_call.1} parent=11 // pred_fallthru
          _
        // Predicated region
        $region17: #{tpu_custom_call.1} parent=11 // pred_check
          %p168 = pneg %p70
        $region18: #{tpu_custom_call.1} parent=11 // pred_check_branch
          %170 = sbr.rel (%p168) target = $region20
        $region19: #{tpu_custom_call.1} parent=11 // pred_region
          _
        $region20: #{tpu_custom_call.1} parent=11 // pred_fallthru
          _
        // Predicated region
        $region21: #{tpu_custom_call.1} parent=11 // pred_check
          %p171 = pneg %p91
        $region22: #{tpu_custom_call.1} parent=11 // pred_check_branch
          %173 = sbr.rel (%p171) target = $region24
        $region23: #{tpu_custom_call.1} parent=11 // pred_region
          %s175 = ssub.s32 6144, 6144
          %176 = vsyncadd [#allocation8], %s175
          %s177 = sshll.u32 [#allocation7], 4
          %s178 = int_to_ptr.vmem [resolvable:$true] %s177
          %183 = dma.hbm_to_vmem [thread:$0]  %s3, 6144, %s178, [#allocation8], 128, 128, 8
        $region24: #{tpu_custom_call.1} parent=11 // pred_fallthru
          _
        // Predicated region
        $region25: #{tpu_custom_call.1} parent=11 // pred_check
          %p184 = pneg %p112
        $region26: #{tpu_custom_call.1} parent=11 // pred_check_branch
          %186 = sbr.rel (%p184) target = $region28
        $region27: #{tpu_custom_call.1} parent=11 // pred_region
          _
        $region28: #{tpu_custom_call.1} parent=11 // pred_fallthru
          _
      $region12: #{tpu_custom_call.1} parent=5 // pred_fallthru
        _
      %p187 = scmp.lt.s32.totalorder %s16, 6
      // Predicated region
      $region29: #{tpu_custom_call.1} parent=5 // pred_check
        %p188 = pneg %p187
      $region30: #{tpu_custom_call.1} parent=5 // pred_check_branch
        %190 = sbr.rel (%p188) target = $region32
      $region31: #{tpu_custom_call.1} parent=5 // pred_region
        _
      $region32: #{tpu_custom_call.1} parent=5 // pred_fallthru
        _
      %p191 = scmp.le.s32.totalorder 1, %s16
      %p192 = scmp.lt.s32.totalorder %s16, 7
      %p193 = pnand %p191, %p192
      %p194 = pneg %p193
      // Predicated region
      $region33: #{tpu_custom_call.1} parent=5 // pred_check
        _
      $region34: #{tpu_custom_call.1} parent=5 // pred_check_branch
        %196 = sbr.rel (%p193) target = $region36
      $region35: #{tpu_custom_call.1} parent=5 // pred_region
        %s197 = ssub.s32 %s16, 1
        // Predicated region
        $region37: #{tpu_custom_call.1} parent=35 // pred_check
          %p198 = pneg %p49
        $region38: #{tpu_custom_call.1} parent=35 // pred_check_branch
          %200 = sbr.rel (%p198) target = $region40
        $region39: #{tpu_custom_call.1} parent=35 // pred_region
          %201 = dma.done [#allocation5], 6144
        $region40: #{tpu_custom_call.1} parent=35 // pred_fallthru
          _
        // Predicated region
        $region41: #{tpu_custom_call.1} parent=35 // pred_check
          %p202 = pneg %p91
        $region42: #{tpu_custom_call.1} parent=35 // pred_check_branch
          %204 = sbr.rel (%p202) target = $region44
        $region43: #{tpu_custom_call.1} parent=35 // pred_region
          %205 = dma.done [#allocation8], 6144
        $region44: #{tpu_custom_call.1} parent=35 // pred_fallthru
          _
        %p206 = pneg %p49
        %p207 = pneg %p46
        %p208 = pneg %p70
        %p209 = pneg %p67
        %p210 = pneg %p91
        %p211 = pneg %p88
        %p212 = pneg %p112
        %p213 = pneg %p109
        %p214 = pneg %p140
        %p215 = pneg %p137
        %s216 = sand.u32 %s127, 1
        %s217 = scalar_lea.sflag [#allocation6], %s216
        %s218 = sand.u32 %s127, 1
        %s219 = smul.addr %s218, 16
        %s220 = scalar_lea.vmem [#allocation9], %s219
        %s221 = smul.u32 2, %s26
        %s222 = smul.u32 %s26, 16
        %s223 = smul.u32 %s25, 56
        %s224 = sadd.s32 %s223, %s222
        %s225 = smul.addr %s224, 16
        %s226 = scalar_lea.hbm %s0, %s225
        // Predicated region
        $region45: #{tpu_custom_call.1} parent=35 // pred_check
          _
        $region46: #{tpu_custom_call.1} parent=35 // pred_check_branch
          %228 = sbr.rel target = $region48
        $region47: #{tpu_custom_call.1} parent=35 // pred_region
          %229 = sst [smem:[#allocation12]] [#allocation11]
          %230 = sst [smem:[#allocation13]] [#allocation10]
        $region48: #{tpu_custom_call.1} parent=35 // pred_fallthru
          _
        %232 = shalt.err (0)
        %s234 = sshll.u32 [#allocation2], 4
        %s235 = int_to_ptr.vmem [resolvable:$true] %s234
        %237 = dma.hbm_to_vmem [thread:$0]  %s226, 320, %s235, [#allocation3]
        %s238 = smul.u32 20, 1
        %s239 = sshll.u32 %s238, 4
        %240 = dma.done [#allocation3], %s239
        %v241 = vld [vmem:[#allocation2] sm:$0xff]
        %v242 = vld [vmem:[#allocation2 + $0x8] sm:$0xff]
        %v243 = vld [vmem:[#allocation2 + $0x10] sm:$0xf]
        %vm247 = vcmask 1046528
        %v248 = vrot.slane %v241, 1
        %v249 = vrot.slane %v242, 1
        %v250 = vsel %vm247, %v248, %v249
        %v251 = vrot.slane %v243, 1
        %v252 = vsel %vm247, %v249, %v251
        %vm256 = vcmask 1045504
        %v257 = vrot.slane %v241, 2
        %v258 = vrot.slane %v242, 2
        %v259 = vsel %vm256, %v257, %v258
        %v260 = vrot.slane %v243, 2
        %v261 = vsel %vm256, %v258, %v260
        %v265 = vld [vmem:[#allocation4] sm:$0xff]
        %v266 = vld [vmem:[#allocation4 + $0x8] sm:$0xff]
        %v267 = vld [vmem:[#allocation4 + $0x10] sm:$0xff]
        %v268 = vld [vmem:[#allocation4 + $0x18] sm:$0xff]
        %v269 = vld [vmem:[#allocation4 + $0x20] sm:$0xff]
        %v270 = vld [vmem:[#allocation4 + $0x28] sm:$0xff]
        %v271 = vld [vmem:[#allocation4 + $0x30] sm:$0xff]
        %v272 = vld [vmem:[#allocation4 + $0x38] sm:$0xff]
        %v273 = vld [vmem:[#allocation4 + $0x40] sm:$0xff]
        %v274 = vld [vmem:[#allocation4 + $0x48] sm:$0xff]
        %v275 = vld [vmem:[#allocation4 + $0x50] sm:$0xff]
        %v276 = vld [vmem:[#allocation4 + $0x58] sm:$0xff]
        %v277 = vld [vmem:[#allocation4 + $0x60] sm:$0xff]
        %v278 = vld [vmem:[#allocation4 + $0x68] sm:$0xff]
        %v279 = vld [vmem:[#allocation4 + $0x70] sm:$0xff]
        %v280 = vld [vmem:[#allocation4 + $0x78] sm:$0xff]
        %v281 = vld [vmem:[#allocation4 + $0x80] sm:$0xff]
        %v282 = vld [vmem:[#allocation4 + $0x88] sm:$0xff]
        %v283 = vld [vmem:[#allocation4 + $0x90] sm:$0xff]
        %v284 = vld [vmem:[#allocation4 + $0x98] sm:$0xff]
        %v285 = vld [vmem:[#allocation4 + $0xa0] sm:$0xff]
        %v286 = vld [vmem:[#allocation4 + $0xa8] sm:$0xff]
        %v287 = vld [vmem:[#allocation4 + $0xb0] sm:$0xff]
        %v288 = vld [vmem:[#allocation4 + $0xb8] sm:$0xff]
        %v289 = vld [vmem:[#allocation4 + $0xc0] sm:$0xff]
        %v290 = vld [vmem:[#allocation4 + $0xc8] sm:$0xff]
        %v291 = vld [vmem:[#allocation4 + $0xd0] sm:$0xff]
        %v292 = vld [vmem:[#allocation4 + $0xd8] sm:$0xff]
        %v293 = vld [vmem:[#allocation4 + $0xe0] sm:$0xff]
        %v294 = vld [vmem:[#allocation4 + $0xe8] sm:$0xff]
        %v295 = vld [vmem:[#allocation4 + $0xf0] sm:$0xff]
        %v296 = vld [vmem:[#allocation4 + $0xf8] sm:$0xff]
        %v297 = vld [vmem:[#allocation4 + $0x100] sm:$0xff]
        %v298 = vld [vmem:[#allocation4 + $0x108] sm:$0xff]
        %v299 = vld [vmem:[#allocation4 + $0x110] sm:$0xff]
        %v300 = vld [vmem:[#allocation4 + $0x118] sm:$0xff]
        %v301 = vld [vmem:[#allocation4 + $0x120] sm:$0xff]
        %v302 = vld [vmem:[#allocation4 + $0x128] sm:$0xff]
        %v303 = vld [vmem:[#allocation4 + $0x130] sm:$0xff]
        %v304 = vld [vmem:[#allocation4 + $0x138] sm:$0xff]
        %v305 = vld [vmem:[#allocation4 + $0x140] sm:$0xff]
        %v306 = vld [vmem:[#allocation4 + $0x148] sm:$0xff]
        %v307 = vld [vmem:[#allocation4 + $0x150] sm:$0xff]
        %v308 = vld [vmem:[#allocation4 + $0x158] sm:$0xff]
        %v309 = vld [vmem:[#allocation4 + $0x160] sm:$0xff]
        %v310 = vld [vmem:[#allocation4 + $0x168] sm:$0xff]
        %v311 = vld [vmem:[#allocation4 + $0x170] sm:$0xff]
        %v312 = vld [vmem:[#allocation4 + $0x178] sm:$0xff]
        %v313 = vld [vmem:[%s2] sm:$0x1]
        %v315 = vlaneseq
        %v316 = vshrl.u32 %v315, 7
        %v317 = vsub.s32 0, %v316
        %v318 = vrot.slane %v313, %v317
        %320 = vmatprep.subr.mxu0 0.0
        %321 = vmatpush1.msra.mxu0 %v280
        %322 = vmatprep.subr.mxu0 0.0
        %323 = vmatpush1.msra.mxu0 %v279
        %324 = vmatprep.subr.mxu0 0.0
        %325 = vmatpush1.msra.mxu0 %v278
        %326 = vmatprep.subr.mxu0 0.0
        %327 = vmatpush1.msra.mxu0 %v277
        %328 = vmatprep.subr.mxu0 0.0
        %329 = vmatpush1.msra.mxu0 %v276
        %330 = vmatprep.subr.mxu0 0.0
        %331 = vmatpush1.msra.mxu0 %v275
        %332 = vmatprep.subr.mxu0 0.0
        %333 = vmatpush1.msra.mxu0 %v274
        %334 = vmatprep.subr.mxu0 0.0
        %335 = vmatpush1.msra.mxu0 %v273
        %336 = vmatprep.subr.mxu0 0.0
        %337 = vmatpush1.msra.mxu0 %v272
        %338 = vmatprep.subr.mxu0 0.0
        %339 = vmatpush1.msra.mxu0 %v271
        %340 = vmatprep.subr.mxu0 0.0
        %341 = vmatpush1.msra.mxu0 %v270
        %342 = vmatprep.subr.mxu0 0.0
        %343 = vmatpush1.msra.mxu0 %v269
        %344 = vmatprep.subr.mxu0 0.0
        %345 = vmatpush1.msra.mxu0 %v268
        %346 = vmatprep.subr.mxu0 0.0
        %347 = vmatpush1.msra.mxu0 %v267
        %348 = vmatprep.subr.mxu0 0.0
        %349 = vmatpush1.msra.mxu0 %v266
        %350 = vmatprep.subr.mxu0 0.0
        %351 = vmatpush1.msra.mxu0 %v265
        %352 = vmatprep.subr.mxu0 0.0
        %353 = vmatpush2.msra.mxu0 %v296
        %354 = vmatprep.subr.mxu0 0.0
        %355 = vmatpush2.msra.mxu0 %v295
        %356 = vmatprep.subr.mxu0 0.0
        %357 = vmatpush2.msra.mxu0 %v294
        %358 = vmatprep.subr.mxu0 0.0
        %359 = vmatpush2.msra.mxu0 %v293
        %360 = vmatprep.subr.mxu0 0.0
        %361 = vmatpush2.msra.mxu0 %v292
        %362 = vmatprep.subr.mxu0 0.0
        %363 = vmatpush2.msra.mxu0 %v291
        %364 = vmatprep.subr.mxu0 0.0
        %365 = vmatpush2.msra.mxu0 %v290
        %366 = vmatprep.subr.mxu0 0.0
        %367 = vmatpush2.msra.mxu0 %v289
        %368 = vmatprep.subr.mxu0 0.0
        %369 = vmatpush2.msra.mxu0 %v288
        %370 = vmatprep.subr.mxu0 0.0
        %371 = vmatpush2.msra.mxu0 %v287
        %372 = vmatprep.subr.mxu0 0.0
        %373 = vmatpush2.msra.mxu0 %v286
        %374 = vmatprep.subr.mxu0 0.0
        %375 = vmatpush2.msra.mxu0 %v285
        %376 = vmatprep.subr.mxu0 0.0
        %377 = vmatpush2.msra.mxu0 %v284
        %378 = vmatprep.subr.mxu0 0.0
        %379 = vmatpush2.msra.mxu0 %v283
        %380 = vmatprep.subr.mxu0 0.0
        %381 = vmatpush2.msra.mxu0 %v282
        %382 = vmatprep.subr.mxu0 0.0
        %383 = vmatpush2.msra.mxu0 %v281
        %384 = vmatprep.mubr.f32.mxu0 %v250
        %385 = vmatmul.mubr.f32.gmra.mxu0 %v241
        %v386 = vpop.f32.mrf.mxu0
        %v387 = vadd.f32 %v318, %v386
        %v388 = vpop.f32.mrf.mxu0
        %389 = vmatprep.mubr.f32.mxu0 %v252
        %390 = vmatmul.mubr.f32.gmra.mxu0 %v242
        %v391 = vpop.f32.mrf.mxu0
        %v392 = vadd.f32 %v318, %v391
        %v393 = vpop.f32.mrf.mxu0
        %394 = vmatprep.mubr.f32.mxu0 %v251
        %395 = vmatmul.mubr.f32.gmra.mxu0 %v243
        %v396 = vpop.f32.mrf.mxu0
        %v397 = vadd.f32 %v318, %v396
        %v398 = vpop.f32.mrf.mxu0
        %399 = vdwg.mxu0
        %400 = vmatprep.subr.mxu0 0.0
        %401 = vmatpush1.msra.mxu0 %v312
        %402 = vmatprep.subr.mxu0 0.0
        %403 = vmatpush1.msra.mxu0 %v311
        %404 = vmatprep.subr.mxu0 0.0
        %405 = vmatpush1.msra.mxu0 %v310
        %406 = vmatprep.subr.mxu0 0.0
        %407 = vmatpush1.msra.mxu0 %v309
        %408 = vmatprep.subr.mxu0 0.0
        %409 = vmatpush1.msra.mxu0 %v308
        %410 = vmatprep.subr.mxu0 0.0
        %411 = vmatpush1.msra.mxu0 %v307
        %412 = vmatprep.subr.mxu0 0.0
        %413 = vmatpush1.msra.mxu0 %v306
        %414 = vmatprep.subr.mxu0 0.0
        %415 = vmatpush1.msra.mxu0 %v305
        %416 = vmatprep.subr.mxu0 0.0
        %417 = vmatpush1.msra.mxu0 %v304
        %418 = vmatprep.subr.mxu0 0.0
        %419 = vmatpush1.msra.mxu0 %v303
        %420 = vmatprep.subr.mxu0 0.0
        %421 = vmatpush1.msra.mxu0 %v302
        %422 = vmatprep.subr.mxu0 0.0
        %423 = vmatpush1.msra.mxu0 %v301
        %424 = vmatprep.subr.mxu0 0.0
        %425 = vmatpush1.msra.mxu0 %v300
        %426 = vmatprep.subr.mxu0 0.0
        %427 = vmatpush1.msra.mxu0 %v299
        %428 = vmatprep.subr.mxu0 0.0
        %429 = vmatpush1.msra.mxu0 %v298
        %430 = vmatprep.subr.mxu0 0.0
        %431 = vmatpush1.msra.mxu0 %v297
        %432 = vmatprep.subr.mxu0 0.0
        %433 = vmatpush2.msra.mxu0 0.0
        %434 = vmatprep.subr.mxu0 0.0
        %435 = vmatpush2.msra.mxu0 0.0
        %436 = vmatprep.subr.mxu0 0.0
        %437 = vmatpush2.msra.mxu0 0.0
        %438 = vmatprep.subr.mxu0 0.0
        %439 = vmatpush2.msra.mxu0 0.0
        %440 = vmatprep.subr.mxu0 0.0
        %441 = vmatpush2.msra.mxu0 0.0
        %442 = vmatprep.subr.mxu0 0.0
        %443 = vmatpush2.msra.mxu0 0.0
        %444 = vmatprep.subr.mxu0 0.0
        %445 = vmatpush2.msra.mxu0 0.0
        %446 = vmatprep.subr.mxu0 0.0
        %447 = vmatpush2.msra.mxu0 0.0
        %448 = vmatprep.subr.mxu0 0.0
        %449 = vmatpush2.msra.mxu0 0.0
        %450 = vmatprep.subr.mxu0 0.0
        %451 = vmatpush2.msra.mxu0 0.0
        %452 = vmatprep.subr.mxu0 0.0
        %453 = vmatpush2.msra.mxu0 0.0
        %454 = vmatprep.subr.mxu0 0.0
        %455 = vmatpush2.msra.mxu0 0.0
        %456 = vmatprep.subr.mxu0 0.0
        %457 = vmatpush2.msra.mxu0 0.0
        %458 = vmatprep.subr.mxu0 0.0
        %459 = vmatpush2.msra.mxu0 0.0
        %460 = vmatprep.subr.mxu0 0.0
        %461 = vmatpush2.msra.mxu0 0.0
        %462 = vmatprep.subr.mxu0 0.0
        %463 = vmatpush2.msra.mxu0 0.0
        %464 = vmatprep.mubr.f32.mxu0 0.0
        %465 = vmatmul.mubr.f32.gmra.mxu0 %v259
        %v466 = vpop.f32.mrf.mxu0
        %v467 = vadd.f32 %v387, %v466
        %v468 = vpop.f32.mrf.mxu0
        %469 = vmatprep.mubr.f32.mxu0 0.0
        %470 = vmatmul.mubr.f32.gmra.mxu0 %v261
        %v471 = vpop.f32.mrf.mxu0
        %v472 = vadd.f32 %v392, %v471
        %v473 = vpop.f32.mrf.mxu0
        %474 = vmatprep.mubr.f32.mxu0 0.0
        %475 = vmatmul.mubr.f32.gmra.mxu0 %v260
        %v476 = vpop.f32.mrf.mxu0
        %v477 = vadd.f32 %v397, %v476
        %v478 = vpop.f32.mrf.mxu0
        %479 = vdwg.mxu0
        %v480 = vmul.f32 %v467, 0.5
        %v481 = vmul.f32 %v472, 0.5
        %v482 = vmul.f32 %v477, 0.5
        %v483 = vmul.f32 %v467, 0.70710677
        %v484 = vmul.f32 %v472, 0.70710677
        %v485 = vmul.f32 %v477, 0.70710677
        %v486 = verf.f32.pop %v483
        %v487 = verf.f32.pop %v484
        %v488 = verf.f32.pop %v485
        %v489 = vadd.f32 %v486, 1.0
        %v490 = vadd.f32 %v487, 1.0
        %v491 = vadd.f32 %v488, 1.0
        %v492 = vmul.f32 %v480, %v489
        %v493 = vmul.f32 %v481, %v490
        %v494 = vmul.f32 %v482, %v491
        %v495 = vlaneseq
        %v496 = vshrl.u32 %v495, 7
        %v497 = vadd.s32 %v496, 8
        %v498 = vadd.s32 %v496, 16
        %s499 = ssub.s32 %s222, 1
        %v500 = vstv %s499
        %v501 = vadd.s32 %v500, %v496
        %v502 = vadd.s32 %v500, %v497
        %v503 = vadd.s32 %v500, %v498
        %vm504 = vcmp.ge.s32.totalorder %v501, 0
        %vm505 = vcmp.ge.s32.totalorder %v502, 0
        %vm506 = vcmp.ge.s32.totalorder %v503, 0
        %vm507 = vcmp.lt.s32.totalorder %v501, 40
        %vm508 = vcmp.lt.s32.totalorder %v502, 40
        %vm509 = vcmp.lt.s32.totalorder %v503, 40
        %vm510 = vmand %vm504, %vm507
        %vm511 = vmand %vm505, %vm508
        %vm512 = vmand %vm506, %vm509
        %v513 = vsel %vm510, 1, 0
        %v514 = vsel %vm511, 1, 0
        %v515 = vsel %vm512, 1, 0
        %vm516 = vcmp.eq.s32.totalorder %v513, 1
        %vm517 = vcmp.eq.s32.totalorder %v514, 1
        %vm518 = vcmp.eq.s32.totalorder %v515, 1
        %v519 = vsel %vm516, %v492, 0.0
        %v520 = vsel %vm517, %v493, 0.0
        %v521 = vsel %vm518, %v494, 0.0
        %v525 = vrot.slane %v519, 1
        %v526 = vrot.slane %v520, 1
        %v527 = vsel %vm247, %v525, %v526
        %v528 = vrot.slane %v521, 1
        %v529 = vsel %vm247, %v526, %v528
        %v532 = vrot.slane %v519, 2
        %v533 = vrot.slane %v520, 2
        %v534 = vsel %vm256, %v532, %v533
        %v535 = vrot.slane %v521, 2
        %v536 = vsel %vm256, %v533, %v535
        %v539 = vld [vmem:[#allocation7] sm:$0xff]
        %v540 = vld [vmem:[#allocation7 + $0x8] sm:$0xff]
        %v541 = vld [vmem:[#allocation7 + $0x10] sm:$0xff]
        %v542 = vld [vmem:[#allocation7 + $0x18] sm:$0xff]
        %v543 = vld [vmem:[#allocation7 + $0x20] sm:$0xff]
        %v544 = vld [vmem:[#allocation7 + $0x28] sm:$0xff]
        %v545 = vld [vmem:[#allocation7 + $0x30] sm:$0xff]
        %v546 = vld [vmem:[#allocation7 + $0x38] sm:$0xff]
        %v547 = vld [vmem:[#allocation7 + $0x40] sm:$0xff]
        %v548 = vld [vmem:[#allocation7 + $0x48] sm:$0xff]
        %v549 = vld [vmem:[#allocation7 + $0x50] sm:$0xff]
        %v550 = vld [vmem:[#allocation7 + $0x58] sm:$0xff]
        %v551 = vld [vmem:[#allocation7 + $0x60] sm:$0xff]
        %v552 = vld [vmem:[#allocation7 + $0x68] sm:$0xff]
        %v553 = vld [vmem:[#allocation7 + $0x70] sm:$0xff]
        %v554 = vld [vmem:[#allocation7 + $0x78] sm:$0xff]
        %v555 = vld [vmem:[#allocation7 + $0x80] sm:$0xff]
        %v556 = vld [vmem:[#allocation7 + $0x88] sm:$0xff]
        %v557 = vld [vmem:[#allocation7 + $0x90] sm:$0xff]
        %v558 = vld [vmem:[#allocation7 + $0x98] sm:$0xff]
        %v559 = vld [vmem:[#allocation7 + $0xa0] sm:$0xff]
        %v560 = vld [vmem:[#allocation7 + $0xa8] sm:$0xff]
        %v561 = vld [vmem:[#allocation7 + $0xb0] sm:$0xff]
        %v562 = vld [vmem:[#allocation7 + $0xb8] sm:$0xff]
        %v563 = vld [vmem:[#allocation7 + $0xc0] sm:$0xff]
        %v564 = vld [vmem:[#allocation7 + $0xc8] sm:$0xff]
        %v565 = vld [vmem:[#allocation7 + $0xd0] sm:$0xff]
        %v566 = vld [vmem:[#allocation7 + $0xd8] sm:$0xff]
        %v567 = vld [vmem:[#allocation7 + $0xe0] sm:$0xff]
        %v568 = vld [vmem:[#allocation7 + $0xe8] sm:$0xff]
        %v569 = vld [vmem:[#allocation7 + $0xf0] sm:$0xff]
        %v570 = vld [vmem:[#allocation7 + $0xf8] sm:$0xff]
        %v571 = vld [vmem:[#allocation7 + $0x100] sm:$0xff]
        %v572 = vld [vmem:[#allocation7 + $0x108] sm:$0xff]
        %v573 = vld [vmem:[#allocation7 + $0x110] sm:$0xff]
        %v574 = vld [vmem:[#allocation7 + $0x118] sm:$0xff]
        %v575 = vld [vmem:[#allocation7 + $0x120] sm:$0xff]
        %v576 = vld [vmem:[#allocation7 + $0x128] sm:$0xff]
        %v577 = vld [vmem:[#allocation7 + $0x130] sm:$0xff]
        %v578 = vld [vmem:[#allocation7 + $0x138] sm:$0xff]
        %v579 = vld [vmem:[#allocation7 + $0x140] sm:$0xff]
        %v580 = vld [vmem:[#allocation7 + $0x148] sm:$0xff]
        %v581 = vld [vmem:[#allocation7 + $0x150] sm:$0xff]
        %v582 = vld [vmem:[#allocation7 + $0x158] sm:$0xff]
        %v583 = vld [vmem:[#allocation7 + $0x160] sm:$0xff]
        %v584 = vld [vmem:[#allocation7 + $0x168] sm:$0xff]
        %v585 = vld [vmem:[#allocation7 + $0x170] sm:$0xff]
        %v586 = vld [vmem:[#allocation7 + $0x178] sm:$0xff]
        %v587 = vld [vmem:[%s4] sm:$0x1]
        %v589 = vlaneseq
        %v590 = vshrl.u32 %v589, 7
        %v591 = vsub.s32 0, %v590
        %v592 = vrot.slane %v587, %v591
        %594 = vmatprep.subr.mxu0 0.0
        %595 = vmatpush1.msra.mxu0 %v554
        %596 = vmatprep.subr.mxu0 0.0
        %597 = vmatpush1.msra.mxu0 %v553
        %598 = vmatprep.subr.mxu0 0.0
        %599 = vmatpush1.msra.mxu0 %v552
        %600 = vmatprep.subr.mxu0 0.0
        %601 = vmatpush1.msra.mxu0 %v551
        %602 = vmatprep.subr.mxu0 0.0
        %603 = vmatpush1.msra.mxu0 %v550
        %604 = vmatprep.subr.mxu0 0.0
        %605 = vmatpush1.msra.mxu0 %v549
        %606 = vmatprep.subr.mxu0 0.0
        %607 = vmatpush1.msra.mxu0 %v548
        %608 = vmatprep.subr.mxu0 0.0
        %609 = vmatpush1.msra.mxu0 %v547
        %610 = vmatprep.subr.mxu0 0.0
        %611 = vmatpush1.msra.mxu0 %v546
        %612 = vmatprep.subr.mxu0 0.0
        %613 = vmatpush1.msra.mxu0 %v545
        %614 = vmatprep.subr.mxu0 0.0
        %615 = vmatpush1.msra.mxu0 %v544
        %616 = vmatprep.subr.mxu0 0.0
        %617 = vmatpush1.msra.mxu0 %v543
        %618 = vmatprep.subr.mxu0 0.0
        %619 = vmatpush1.msra.mxu0 %v542
        %620 = vmatprep.subr.mxu0 0.0
        %621 = vmatpush1.msra.mxu0 %v541
        %622 = vmatprep.subr.mxu0 0.0
        %623 = vmatpush1.msra.mxu0 %v540
        %624 = vmatprep.subr.mxu0 0.0
        %625 = vmatpush1.msra.mxu0 %v539
        %626 = vmatprep.subr.mxu0 0.0
        %627 = vmatpush2.msra.mxu0 %v570
        %628 = vmatprep.subr.mxu0 0.0
        %629 = vmatpush2.msra.mxu0 %v569
        %630 = vmatprep.subr.mxu0 0.0
        %631 = vmatpush2.msra.mxu0 %v568
        %632 = vmatprep.subr.mxu0 0.0
        %633 = vmatpush2.msra.mxu0 %v567
        %634 = vmatprep.subr.mxu0 0.0
        %635 = vmatpush2.msra.mxu0 %v566
        %636 = vmatprep.subr.mxu0 0.0
        %637 = vmatpush2.msra.mxu0 %v565
        %638 = vmatprep.subr.mxu0 0.0
        %639 = vmatpush2.msra.mxu0 %v564
        %640 = vmatprep.subr.mxu0 0.0
        %641 = vmatpush2.msra.mxu0 %v563
        %642 = vmatprep.subr.mxu0 0.0
        %643 = vmatpush2.msra.mxu0 %v562
        %644 = vmatprep.subr.mxu0 0.0
        %645 = vmatpush2.msra.mxu0 %v561
        %646 = vmatprep.subr.mxu0 0.0
        %647 = vmatpush2.msra.mxu0 %v560
        %648 = vmatprep.subr.mxu0 0.0
        %649 = vmatpush2.msra.mxu0 %v559
        %650 = vmatprep.subr.mxu0 0.0
        %651 = vmatpush2.msra.mxu0 %v558
        %652 = vmatprep.subr.mxu0 0.0
        %653 = vmatpush2.msra.mxu0 %v557
        %654 = vmatprep.subr.mxu0 0.0
        %655 = vmatpush2.msra.mxu0 %v556
        %656 = vmatprep.subr.mxu0 0.0
        %657 = vmatpush2.msra.mxu0 %v555
        %658 = vmatprep.mubr.f32.mxu0 %v527
        %659 = vmatmul.mubr.f32.gmra.mxu0 %v519
        %v660 = vpop.f32.mrf.mxu0
        %v661 = vadd.f32 %v592, %v660
        %v662 = vpop.f32.mrf.mxu0
        %663 = vmatprep.mubr.f32.mxu0 %v529
        %664 = vmatmul.mubr.f32.gmra.mxu0 %v520
        %v665 = vpop.f32.mrf.mxu0
        %v666 = vadd.f32 %v592, %v665
        %v667 = vpop.f32.mrf.mxu0
        %668 = vdwg.mxu0
        %669 = vmatprep.subr.mxu0 0.0
        %670 = vmatpush1.msra.mxu0 %v586
        %671 = vmatprep.subr.mxu0 0.0
        %672 = vmatpush1.msra.mxu0 %v585
        %673 = vmatprep.subr.mxu0 0.0
        %674 = vmatpush1.msra.mxu0 %v584
        %675 = vmatprep.subr.mxu0 0.0
        %676 = vmatpush1.msra.mxu0 %v583
        %677 = vmatprep.subr.mxu0 0.0
        %678 = vmatpush1.msra.mxu0 %v582
        %679 = vmatprep.subr.mxu0 0.0
        %680 = vmatpush1.msra.mxu0 %v581
        %681 = vmatprep.subr.mxu0 0.0
        %682 = vmatpush1.msra.mxu0 %v580
        %683 = vmatprep.subr.mxu0 0.0
        %684 = vmatpush1.msra.mxu0 %v579
        %685 = vmatprep.subr.mxu0 0.0
        %686 = vmatpush1.msra.mxu0 %v578
        %687 = vmatprep.subr.mxu0 0.0
        %688 = vmatpush1.msra.mxu0 %v577
        %689 = vmatprep.subr.mxu0 0.0
        %690 = vmatpush1.msra.mxu0 %v576
        %691 = vmatprep.subr.mxu0 0.0
        %692 = vmatpush1.msra.mxu0 %v575
        %693 = vmatprep.subr.mxu0 0.0
        %694 = vmatpush1.msra.mxu0 %v574
        %695 = vmatprep.subr.mxu0 0.0
        %696 = vmatpush1.msra.mxu0 %v573
        %697 = vmatprep.subr.mxu0 0.0
        %698 = vmatpush1.msra.mxu0 %v572
        %699 = vmatprep.subr.mxu0 0.0
        %700 = vmatpush1.msra.mxu0 %v571
        %701 = vmatprep.subr.mxu0 0.0
        %702 = vmatpush2.msra.mxu0 0.0
        %703 = vmatprep.subr.mxu0 0.0
        %704 = vmatpush2.msra.mxu0 0.0
        %705 = vmatprep.subr.mxu0 0.0
        %706 = vmatpush2.msra.mxu0 0.0
        %707 = vmatprep.subr.mxu0 0.0
        %708 = vmatpush2.msra.mxu0 0.0
        %709 = vmatprep.subr.mxu0 0.0
        %710 = vmatpush2.msra.mxu0 0.0
        %711 = vmatprep.subr.mxu0 0.0
        %712 = vmatpush2.msra.mxu0 0.0
        %713 = vmatprep.subr.mxu0 0.0
        %714 = vmatpush2.msra.mxu0 0.0
        %715 = vmatprep.subr.mxu0 0.0
        %716 = vmatpush2.msra.mxu0 0.0
        %717 = vmatprep.subr.mxu0 0.0
        %718 = vmatpush2.msra.mxu0 0.0
        %719 = vmatprep.subr.mxu0 0.0
        %720 = vmatpush2.msra.mxu0 0.0
        %721 = vmatprep.subr.mxu0 0.0
        %722 = vmatpush2.msra.mxu0 0.0
        %723 = vmatprep.subr.mxu0 0.0
        %724 = vmatpush2.msra.mxu0 0.0
        %725 = vmatprep.subr.mxu0 0.0
        %726 = vmatpush2.msra.mxu0 0.0
        %727 = vmatprep.subr.mxu0 0.0
        %728 = vmatpush2.msra.mxu0 0.0
        %729 = vmatprep.subr.mxu0 0.0
        %730 = vmatpush2.msra.mxu0 0.0
        %731 = vmatprep.subr.mxu0 0.0
        %732 = vmatpush2.msra.mxu0 0.0
        %733 = vmatprep.mubr.f32.mxu0 0.0
        %734 = vmatmul.mubr.f32.gmra.mxu0 %v534
        %v735 = vpop.f32.mrf.mxu0
        %v736 = vadd.f32 %v661, %v735
        %v737 = vpop.f32.mrf.mxu0
        %738 = vmatprep.mubr.f32.mxu0 0.0
        %739 = vmatmul.mubr.f32.gmra.mxu0 %v536
        %v740 = vpop.f32.mrf.mxu0
        %v741 = vadd.f32 %v666, %v740
        %v742 = vpop.f32.mrf.mxu0
        %743 = vdwg.mxu0
        %v744 = vmul.f32 %v736, 0.5
        %v745 = vmul.f32 %v741, 0.5
        %v746 = vmul.f32 %v736, 0.70710677
        %v747 = vmul.f32 %v741, 0.70710677
        %v748 = verf.f32.pop %v746
        %v749 = verf.f32.pop %v747
        %v750 = vadd.f32 %v748, 1.0
        %v751 = vadd.f32 %v749, 1.0
        %v752 = vmul.f32 %v744, %v750
        %v753 = vmul.f32 %v745, %v751
        %754 = vst [vmem:[%s220] sm:$0xff] %v752
        %755 = vst [vmem:[%s220 + $0x8] sm:$0xff] %v753
        %s756 = sand.u32 %s127, 1
        %s757 = scalar_lea.sflag [#allocation6], %s756
        %s758 = sand.u32 %s127, 1
        %s759 = smul.addr %s758, 16
        %s760 = scalar_lea.vmem [#allocation9], %s759
        // Predicated region
        $region49: #{tpu_custom_call.1} parent=35 // pred_check
          %p761 = pneg %p137
        $region50: #{tpu_custom_call.1} parent=35 // pred_check_branch
          %763 = sbr.rel (%p761) target = $region52
        $region51: #{tpu_custom_call.1} parent=35 // pred_region
          %s764 = smul.u32 2, %s26
          %s766 = ssub.s32 256, 256
          %767 = vsyncadd %s757, %s766
          %s768 = smul.addr %s25, 6
          %s769 = sadd.s32 %s764, %s768
          %s770 = smul.addr %s769, 128
          %s771 = scalar_lea.hbm %s5, %s770
          %s772 = sshll.u32 %s760, 4
          %s773 = int_to_ptr.vmem [resolvable:$true] %s772
          %778 = dma.vmem_to_hbm [thread:$0]  %s773, 256, %s771, %s757, 128, 128, 8
        $region52: #{tpu_custom_call.1} parent=35 // pred_fallthru
          _
      $region36: #{tpu_custom_call.1} parent=5 // pred_fallthru
        _
      %p779 = scmp.le.s32.totalorder 2, %s16
      // Predicated region
      $region53: #{tpu_custom_call.1} parent=5 // pred_check
        %p780 = pneg %p779
      $region54: #{tpu_custom_call.1} parent=5 // pred_check_branch
        %782 = sbr.rel (%p780) target = $region56
      $region55: #{tpu_custom_call.1} parent=5 // pred_region
        %s783 = ssub.s32 %s16, 2
        // Predicated region
        $region57: #{tpu_custom_call.1} parent=55 // pred_check
          %p784 = pneg %p143
        $region58: #{tpu_custom_call.1} parent=55 // pred_check_branch
          %786 = sbr.rel (%p784) target = $region60
        $region59: #{tpu_custom_call.1} parent=55 // pred_region
          %s787 = sand.u32 %s128, 1
          %s788 = scalar_lea.sflag [#allocation6], %s787
          %s789 = sand.u32 %s128, 1
          %s790 = smul.addr %s789, 16
          %s791 = scalar_lea.vmem [#allocation9], %s790
          %792 = dma.done %s788, 256
        $region60: #{tpu_custom_call.1} parent=55 // pred_fallthru
          _
      $region56: #{tpu_custom_call.1} parent=5 // pred_fallthru
        _
    $region6: #{tpu_custom_call.1} parent=1 // loop_footer
      %s20 = sadd.s32 1, %s16
    $region7: #{tpu_custom_call.1} parent=1 // loop_footer_branch
      %15 = sbr.rel target = $region3
    $region8: #{tpu_custom_call.1} parent=1 // loop_exit
      _
    %793 = vsyncpa [#allocation5], 1
    %s794 = scalar_lea.sflag [#allocation5], 1
    %795 = vsyncpa %s794, 1
    %796 = vsyncpa [#allocation8], 1
    %797 = vsyncpa [#allocation6], 1
    %s798 = scalar_lea.sflag [#allocation6], 1
    %799 = vsyncpa %s798, 1
  %800 = vsyncmov [#allocation3]
  %s801 = vpop.sfrf %800
  %p802 = scmp.eq.s32.totalorder %s801, 0
  %p803 = pneg %p802
  %805 = shalt.err (%p803)

</llo_original>
